<compile_context>
chip_gen: v6e
topology: v6e:2x2x1
jax: 0.10.0
libtpu: 0.0.40
codegen_flags: <defaults>
</compile_context>

<pallas_src>
import functools

import jax
import jax.numpy as jnp
from jax.experimental import pallas as pl
from jax.experimental.pallas import tpu as pltpu


def _soft_dice_partial_kernel(logits_ref, target_ref, part_ref, *,
                              n_total, tile_n, use_mxu):
    i = pl.program_id(0)

    x = logits_ref[...].astype(jnp.float32)            # (TILE_N, C)
    tgt = target_ref[...]                               # (TILE_N, 1) int32
    tn, c = x.shape

    # Valid-row mask for the (possibly overhanging) last block.  There is no
    # wrapper-side padding anymore, so tail rows of the last block contain
    # garbage -- sanitize before exp so they cannot produce Inf/NaN.
    row_idx = i * tile_n + jax.lax.broadcasted_iota(jnp.int32, (tn, 1), 0)
    valid_b = row_idx < n_total                          # (TILE_N, 1) bool
    valid = valid_b.astype(jnp.float32)
    x = jnp.where(valid_b, x, 0.0)

    # Numerically stable softmax pieces; probs / one-hot never materialized.
    row_max = jnp.max(x, axis=1, keepdims=True)          # XLU
    ex = jnp.exp(x - row_max)                            # EUP, (TILE_N, C) f32

    # exp value at the target class per row (select instead of float one-hot).
    col = jax.lax.broadcasted_iota(jnp.int32, (tn, c), 1)
    sel_mat = jnp.where(col == tgt, ex, 0.0)

    if use_mxu:
        # Offload the two lane reductions to the (otherwise idle) MXU: a dot
        # with ones((C, 128)) replicates the row sum across lanes; take lane 0.
        # HIGHEST keeps full f32 precision so the 1e-5 tolerance holds.
        ones_c = jnp.ones((c, 128), jnp.float32)
        denom = jnp.dot(ex, ones_c, precision=jax.lax.Precision.HIGHEST,
                        preferred_element_type=jnp.float32)[:, :1]
        sel = jnp.dot(sel_mat, ones_c, precision=jax.lax.Precision.HIGHEST,
                      preferred_element_type=jnp.float32)[:, :1]
    else:
        denom = jnp.sum(ex, axis=1, keepdims=True)        # (TILE_N, 1)
        sel = jnp.sum(sel_mat, axis=1, keepdims=True)     # (TILE_N, 1)

    recip = pl.reciprocal(denom, approx=False)            # exact (1e-5 tol)

    # Rows whose target is out of [0, C) contribute a zero one-hot row.
    in_range = jnp.logical_and(tgt >= 0, tgt < c).astype(jnp.float32)

    inter_p = jnp.sum(valid * sel * recip)                 # sum(probs * one_hot)
    # sum(probs) over valid rows == exact valid-row count (softmax rows sum
    # to 1); computed from scalars instead of sum(denom * recip).
    m1_p = jnp.minimum(n_total - i * tile_n, tile_n).astype(jnp.float32)
    m2_p = jnp.sum(valid * in_range)                        # sum(one_hot)

    # Pack the three partials into a lane-dense (8, 128) block: row 0,
    # lanes 0/1/2 hold inter/m1/m2, everything else is zero.
    lane = jax.lax.broadcasted_iota(jnp.int32, (8, 128), 1)
    row = jax.lax.broadcasted_iota(jnp.int32, (8, 128), 0)
    vals = jnp.where((row == 0) & (lane == 0), inter_p,
           jnp.where((row == 0) & (lane == 1), m1_p,
           jnp.where((row == 0) & (lane == 2), m2_p, 0.0)))
    part_ref[0] = vals


def _vmem_capacity_bytes():
    try:
        cap = int(pltpu.get_tpu_info().vmem_capacity_bytes)
        if cap > 0:
            return cap
    except Exception:
        pass
    return 64 * 1024 * 1024          # conservative fallback (v7x per-TC VMEM)


def _per_row_bytes(c, itemsize, use_mxu):
    """Approximate VMEM bytes needed per logits row inside the kernel."""
    b = 2 * c * itemsize             # native-dtype logits block, double-buffered
    b += 2 * 4 * c                   # f32 cast + exp temporaries
    if use_mxu:
        b += 4 * c                   # masked exp copy for the selected-class dot
        b += 2 * 128 * 4             # two lane-replicated (TILE_N, 128) dot outputs
    b += 2 * 128 * 4                 # (TILE_N, 1) i32 target block, lane-padded, x2 buffers
    b += 6 * 128 * 4                 # ~6 live (TILE_N, 1) f32 columns, lane-padded
    return b


def _sublane_pack(itemsize):
    return {4: 8, 2: 16, 1: 32}.get(itemsize, 8)


def soft_dice_loss(logits, target, eps=1e-8, tile_n=None):
    """logits: (N, C) float (any dtype, e.g. bf16); target: (N,) int class ids."""
    N, C = logits.shape
    itemsize = jnp.dtype(logits.dtype).itemsize
    sub = _sublane_pack(itemsize)
    use_mxu = C >= 128               # offload lane reductions to the MXU for wide rows

    vmem_cap = _vmem_capacity_bytes()
    budget = int(vmem_cap * 0.4)          # kernel working-set target
    vmem_limit = int(vmem_cap * 0.75)     # scoped-VMEM limit with headroom

    per_row = _per_row_bytes(C, itemsize, use_mxu)
    if tile_n is None:
        if sub * per_row > budget:
            # TODO(synk): add a second grid axis over C (flash-softmax style
            # online max/denominator accumulation) for very large class counts.
            raise ValueError(
                f"C={C} too large for single-axis row tiling on this TPU generation")
        t = max(sub, (budget // per_row) // sub * sub)
        # Keep >= 2 grid steps so v7x's two TensorCores both get work.
        half = ((-(-N // 2) + sub - 1) // sub) * sub
        tile_n = min(t, max(sub, half))
    else:
        tile_n = max(sub, (tile_n // sub) * sub)

    num_tiles = -(-N // tile_n)
    target2d = target.astype(jnp.int32).reshape(N, 1)

    flops = 5 * N * C + (4 * N * C * 128 if use_mxu else 0)
    cost = pl.CostEstimate(
        flops=flops,
        transcendentals=N * C,
        bytes_accessed=N * C * itemsize + N * 4 + num_tiles * 8 * 128 * 4,
    )

    partials = pl.pallas_call(
        functools.partial(_soft_dice_partial_kernel, n_total=N, tile_n=tile_n,
                          use_mxu=use_mxu),
        out_shape=jax.ShapeDtypeStruct((num_tiles, 8, 128), jnp.float32),
        grid=(num_tiles,),
        in_specs=[
            pl.BlockSpec((tile_n, C), lambda i: (i, 0)),
            pl.BlockSpec((tile_n, 1), lambda i: (i, 0)),
        ],
        out_specs=pl.BlockSpec((1, 8, 128), lambda i: (i, 0, 0)),
        compiler_params=pltpu.CompilerParams(
            dimension_semantics=("parallel",),
            vmem_limit_bytes=vmem_limit,
        ),
        cost_estimate=cost,
    )(logits, target2d)     # native dtype in; f32 cast happens inside the kernel

    sums = jnp.sum(partials, axis=(0, 1))   # (128,) -- only lanes 0..2 are nonzero
    inter, m1, m2 = sums[0], sums[1], sums[2]
    score = 2.0 * (inter + eps) / (m1 + m2 + eps)
    return 1.0 - score


def _reference(logits, target, eps=1e-8):
    probs = jax.nn.softmax(logits.astype(jnp.float32), axis=1)
    gt = jax.nn.one_hot(target, logits.shape[1], dtype=jnp.float32)
    inter = jnp.sum(probs * gt)
    score = 2.0 * (inter + eps) / (jnp.sum(probs) + jnp.sum(gt) + eps)
    return 1.0 - score


if __name__ == "__main__":
    key = jax.random.PRNGKey(0)
    k1, k2, k3, k4 = jax.random.split(key, 4)

    # Case 1: f32 logits, small C (XLU reduction path); N not a multiple of
    # the tile and tile_n forced to 8 to exercise multiple grid steps plus the
    # in-kernel ragged-tail mask (no wrapper padding anymore).
    N1, C1 = 14, 32
    logits1 = jax.random.normal(k1, (N1, C1), dtype=jnp.float32)
    target1 = jax.random.randint(k2, (N1,), 0, C1, dtype=jnp.int32)
    loss1 = jax.block_until_ready(soft_dice_loss(logits1, target1, tile_n=8))
    ref1 = _reference(logits1, target1)
    assert jnp.allclose(loss1, ref1, atol=1e-5, rtol=1e-5), (loss1, ref1)

    # Case 2: bf16 logits with C >= 128 (MXU reduction path), auto tile sizing
    # (bf16 sublane pack of 16) and a ragged last tile.
    N2, C2 = 24, 160
    logits2 = jax.random.normal(k3, (N2, C2), dtype=jnp.float32).astype(jnp.bfloat16)
    target2 = jax.random.randint(k4, (N2,), 0, C2, dtype=jnp.int32)
    loss2 = jax.block_until_ready(soft_dice_loss(logits2, target2))
    ref2 = _reference(logits2, target2)
    assert jnp.allclose(loss2, ref2, atol=1e-5, rtol=1e-5), (loss2, ref2)

    print("KERNEL_OK")
</pallas_src>

<mosaic_0001>
module attributes {stable_mosaic.version = 11 : i64} {
  func.func @_soft_dice_partial_kernel(%arg0: i32, %arg1: memref<8x32xf32, #tpu.memory_space<vmem>>, %arg2: memref<8x1xi32, #tpu.memory_space<vmem>>, %arg3: memref<1x8x128xf32, #tpu.memory_space<vmem>>) attributes {dimension_semantics = [#tpu.dimension_semantics<parallel>], iteration_bounds = array<i64: 2>, scalar_prefetch = 0 : i64, scratch_operands = 0 : i64, tpu.core_type = #tpu.core_type<tc>, window_params = [{transform_indices = @transform_0, window_bounds = array<i64: 8, 32>}, {transform_indices = @transform_1, window_bounds = array<i64: 8, 1>}, {transform_indices = @transform_2, window_bounds = array<i64: 1, 8, 128>}]} {
    %c0 = arith.constant 0 : index
    %c0_0 = arith.constant 0 : index
    %0 = vector.load %arg1[%c0, %c0_0] : memref<8x32xf32, #tpu.memory_space<vmem>>, vector<8x32xf32>
    %c0_1 = arith.constant 0 : index
    %c0_2 = arith.constant 0 : index
    %1 = vector.load %arg2[%c0_1, %c0_2] : memref<8x1xi32, #tpu.memory_space<vmem>>, vector<8x1xi32>
    %c8_i32 = arith.constant 8 : i32
    %2 = arith.muli %arg0, %c8_i32 : i32
    %3 = tpu.iota {dimensions = array<i32: 0>} : vector<8x1xi32>
    %4 = vector.broadcast %2 : i32 to vector<8x1xi32>
    %5 = arith.addi %4, %3 : vector<8x1xi32>
    %c14_i32 = arith.constant 14 : i32
    %6 = vector.broadcast %c14_i32 : i32 to vector<8x1xi32>
    %7 = arith.cmpi slt, %5, %6 : vector<8x1xi32>
    %8 = arith.extui %7 : vector<8x1xi1> to vector<8x1xi32>
    %9 = arith.sitofp %8 : vector<8x1xi32> to vector<8x1xf32>
    %cst = arith.constant 0.000000e+00 : f32
    %10 = vector.shape_cast %7 : vector<8x1xi1> to vector<8x1xi1>
    %11 = vector.broadcast %10 : vector<8x1xi1> to vector<8x32xi1>
    %12 = vector.broadcast %cst : f32 to vector<8x32xf32>
    %13 = arith.select %11, %0, %12 : vector<8x32xi1>, vector<8x32xf32>
    %cst_3 = arith.constant dense<0xFF800000> : vector<8xf32>
    %14 = vector.multi_reduction <maximumf>, %13, %cst_3 [1] : vector<8x32xf32> to vector<8xf32>
    %15 = vector.shape_cast %14 : vector<8xf32> to vector<8x1xf32>
    %16 = vector.broadcast %15 : vector<8x1xf32> to vector<8x32xf32>
    %17 = arith.subf %13, %16 : vector<8x32xf32>
    %18 = math.exp %17 : vector<8x32xf32>
    %19 = tpu.iota {dimensions = array<i32: 1>} : vector<8x32xi32>
    %20 = vector.broadcast %1 : vector<8x1xi32> to vector<8x32xi32>
    %21 = arith.cmpi eq, %19, %20 : vector<8x32xi32>
    %cst_4 = arith.constant 0.000000e+00 : f32
    %22 = vector.broadcast %cst_4 : f32 to vector<8x32xf32>
    %23 = arith.select %21, %18, %22 : vector<8x32xi1>, vector<8x32xf32>
    %cst_5 = arith.constant dense<0.000000e+00> : vector<8xf32>
    %24 = vector.multi_reduction <add>, %18, %cst_5 [1] : vector<8x32xf32> to vector<8xf32>
    %25 = vector.shape_cast %24 : vector<8xf32> to vector<8x1xf32>
    %cst_6 = arith.constant dense<0.000000e+00> : vector<8xf32>
    %26 = vector.multi_reduction <add>, %23, %cst_6 [1] : vector<8x32xf32> to vector<8xf32>
    %27 = vector.shape_cast %26 : vector<8xf32> to vector<8x1xf32>
    %28 = tpu.reciprocal %25 : vector<8x1xf32> -> vector<8x1xf32>
    %c0_i32 = arith.constant 0 : i32
    %29 = vector.broadcast %c0_i32 : i32 to vector<8x1xi32>
    %30 = arith.cmpi sge, %1, %29 : vector<8x1xi32>
    %c32_i32 = arith.constant 32 : i32
    %31 = vector.broadcast %c32_i32 : i32 to vector<8x1xi32>
    %32 = arith.cmpi slt, %1, %31 : vector<8x1xi32>
    %33 = arith.andi %30, %32 : vector<8x1xi1>
    %34 = arith.extui %33 : vector<8x1xi1> to vector<8x1xi32>
    %35 = arith.sitofp %34 : vector<8x1xi32> to vector<8x1xf32>
    %36 = arith.mulf %9, %27 : vector<8x1xf32>
    %37 = arith.mulf %36, %28 : vector<8x1xf32>
    %38 = vector.shape_cast %37 : vector<8x1xf32> to vector<1x8x1xf32>
    %cst_7 = arith.constant dense<0.000000e+00> : vector<1xf32>
    %39 = vector.multi_reduction <add>, %38, %cst_7 [1, 2] : vector<1x8x1xf32> to vector<1xf32>
    %40 = vector.shape_cast %39 : vector<1xf32> to vector<1x1x1xf32>
    %41 = vector.extract %40[0, 0, 0] : f32 from vector<1x1x1xf32>
    %c8_i32_8 = arith.constant 8 : i32
    %42 = arith.muli %arg0, %c8_i32_8 : i32
    %c14_i32_9 = arith.constant 14 : i32
    %43 = arith.subi %c14_i32_9, %42 : i32
    %c8_i32_10 = arith.constant 8 : i32
    %44 = arith.minsi %43, %c8_i32_10 : i32
    %45 = arith.sitofp %44 : i32 to f32
    %46 = arith.mulf %9, %35 : vector<8x1xf32>
    %47 = vector.shape_cast %46 : vector<8x1xf32> to vector<1x8x1xf32>
    %cst_11 = arith.constant dense<0.000000e+00> : vector<1xf32>
    %48 = vector.multi_reduction <add>, %47, %cst_11 [1, 2] : vector<1x8x1xf32> to vector<1xf32>
    %49 = vector.shape_cast %48 : vector<1xf32> to vector<1x1x1xf32>
    %50 = vector.extract %49[0, 0, 0] : f32 from vector<1x1x1xf32>
    %51 = tpu.iota {dimensions = array<i32: 1>} : vector<8x128xi32>
    %52 = tpu.iota {dimensions = array<i32: 0>} : vector<8x128xi32>
    %c0_i32_12 = arith.constant 0 : i32
    %53 = vector.broadcast %c0_i32_12 : i32 to vector<8x128xi32>
    %54 = arith.cmpi eq, %52, %53 : vector<8x128xi32>
    %c0_i32_13 = arith.constant 0 : i32
    %55 = vector.broadcast %c0_i32_13 : i32 to vector<8x128xi32>
    %56 = arith.cmpi eq, %51, %55 : vector<8x128xi32>
    %57 = arith.andi %54, %56 : vector<8x128xi1>
    %c0_i32_14 = arith.constant 0 : i32
    %58 = vector.broadcast %c0_i32_14 : i32 to vector<8x128xi32>
    %59 = arith.cmpi eq, %52, %58 : vector<8x128xi32>
    %c1_i32 = arith.constant 1 : i32
    %60 = vector.broadcast %c1_i32 : i32 to vector<8x128xi32>
    %61 = arith.cmpi eq, %51, %60 : vector<8x128xi32>
    %62 = arith.andi %59, %61 : vector<8x128xi1>
    %c0_i32_15 = arith.constant 0 : i32
    %63 = vector.broadcast %c0_i32_15 : i32 to vector<8x128xi32>
    %64 = arith.cmpi eq, %52, %63 : vector<8x128xi32>
    %c2_i32 = arith.constant 2 : i32
    %65 = vector.broadcast %c2_i32 : i32 to vector<8x128xi32>
    %66 = arith.cmpi eq, %51, %65 : vector<8x128xi32>
    %67 = arith.andi %64, %66 : vector<8x128xi1>
    %cst_16 = arith.constant 0.000000e+00 : f32
    %68 = vector.broadcast %50 : f32 to vector<8x128xf32>
    %69 = vector.broadcast %cst_16 : f32 to vector<8x128xf32>
    %70 = arith.select %67, %68, %69 : vector<8x128xi1>, vector<8x128xf32>
    %71 = vector.broadcast %45 : f32 to vector<8x128xf32>
    %72 = arith.select %62, %71, %70 : vector<8x128xi1>, vector<8x128xf32>
    %73 = vector.broadcast %41 : f32 to vector<8x128xf32>
    %74 = arith.select %57, %73, %72 : vector<8x128xi1>, vector<8x128xf32>
    %c0_17 = arith.constant 0 : index
    %c0_18 = arith.constant 0 : index
    %c0_19 = arith.constant 0 : index
    %75 = vector.load %arg3[%c0_17, %c0_18, %c0_19] : memref<1x8x128xf32, #tpu.memory_space<vmem>>, vector<1x8x128xf32>
    %76 = vector.shape_cast %75 : vector<1x8x128xf32> to vector<8x128xf32>
    %77 = vector.shape_cast %74 : vector<8x128xf32> to vector<1x8x128xf32>
    tpu.vector_store %arg3[%c0_17, %c0_18, %c0_19], %77 {strides = array<i32>} : memref<1x8x128xf32, #tpu.memory_space<vmem>>, vector<1x8x128xf32>,
    return
  }
  func.func @transform_0(%arg0: i32) -> (i32, i32) {
    %c0_i32 = arith.constant 0 : i32
    %c0_i32_0 = arith.constant 0 : i32
    return %arg0, %c0_i32 : i32, i32
  }
  func.func @transform_1(%arg0: i32) -> (i32, i32) {
    %c0_i32 = arith.constant 0 : i32
    %c0_i32_0 = arith.constant 0 : i32
    return %arg0, %c0_i32 : i32, i32
  }
  func.func @transform_2(%arg0: i32) -> (i32, i32, i32) {
    %c0_i32 = arith.constant 0 : i32
    %c0_i32_0 = arith.constant 0 : i32
    %c0_i32_1 = arith.constant 0 : i32
    return %arg0, %c0_i32, %c0_i32_0 : i32, i32, i32
  }
}

</mosaic_0001>

<llo_original>
// kernel: tpu_custom_call.1
$region0: #{tpu_custom_call.1}
  #allocation0 [shape = 'u32[]', space=smem, size = 0x4, offset = 0x4, fixed_abs, tag = 'smem constant byte address 0x4 - core index']
  #allocation1 [shape = 'u32[144,128]{1,0:T(1,128)}', space=vmem, size = 0x12000, scoped, tag = 'internal scratch']
  %s0 = inlined_call_operand.vmem [shape: f32[14,32], index: 0, kind: input, shape index: {}]
  %s1 = inlined_call_operand.vmem [shape: s32[14,1], index: 1, kind: input, shape index: {}]
  %s2 = inlined_call_operand.hbm [shape: f32[2,8,128], index: 2, kind: output, shape index: {}]
  %s3 = sld [smem:[#allocation0]]
  $region41: #{tpu_custom_call.1} parent=0
    _
  %s5 = ssub.s32 1, %s3
  %s6 = scalar_select 0, %s5, %s3
  $region1: #{tpu_custom_call.1} parent=0
    #allocation2 [shape = 'u8[8192]{0}', space=vmem, size = 0x2000, scoped, tag = 'output window, operand 0']
    #allocation3 [shape = 's32[2]{0}', space=sflag, size = 0x8, scoped, tag = 'scoped memory for tpu_custom_call.1']
    %7 = vsyncpa [#allocation3], 0
    %s8 = scalar_lea.sflag [#allocation3], 1
    %9 = vsyncpa %s8, 0
    loop: start=0, step=1, limit=4
    $region2: #{tpu_custom_call.1} parent=1 // loop_pre_header
      _
    $region3: #{tpu_custom_call.1} parent=1 // loop_header
      %s11 = sphi 0, %s15
      %p12 = scmp.ge.s32.totalorder %s11, 4
      %s21 = sphi 0, %s23
      %s24 = sphi 0, %s21
      %s25 = sphi 0, %s24
      %s41 = sphi 0, %s25
      %s47 = sphi 0, %s49
      %s50 = sphi 0, %s47
      %s51 = sphi 0, %s50
      %s67 = sphi 0, %s51
      %s73 = sphi 0, %s75
      %s76 = sphi 0, %s73
      %s77 = sphi 0, %s76
      %s93 = sphi 0, %s77
    $region4: #{tpu_custom_call.1} parent=1 // loop_header_branch
      %14 = sbr.rel (%p12) target = $region8
    $region5: #{tpu_custom_call.1} parent=1 // loop_body
      %s16 = ssub.s32 %s11, 1
      %s17 = ssub.s32 %s11, 2
      %s18 = sadd.s32 %s11, 1
      %s19 = ssub.s32 %s11, %s18
      %p20 = scmp.eq.s32.totalorder %s19, 0
      %s22 = sadd.s32 %s21, 1
      %s23 = scalar_select %p20, %s21, %s22
      %p26 = pneg %p20
      %p27 = scmp.eq.s32.totalorder %s11, 1
      %p28 = por %p26, %p27
      %p29 = scmp.ne.s32.totalorder %s21, %s24
      %p30 = scmp.eq.s32.totalorder %s11, 0
      %p31 = por %p29, %p30
      %p32 = scmp.ne.s32.totalorder %s21, %s24
      %p33 = scmp.eq.s32.totalorder %s16, 1
      %p34 = por %p32, %p33
      %p35 = scmp.ne.s32.totalorder %s24, %s25
      %p36 = scmp.eq.s32.totalorder %s16, 0
      %p37 = por %p35, %p36
      %p38 = scmp.ne.s32.totalorder %s24, %s25
      %p39 = scmp.eq.s32.totalorder %s17, 1
      %p40 = por %p38, %p39
      %p42 = scmp.ne.s32.totalorder %s25, %s41
      %p43 = scmp.eq.s32.totalorder %s17, 0
      %p44 = por %p42, %p43
      %s45 = ssub.s32 %s11, %s18
      %p46 = scmp.eq.s32.totalorder %s45, 0
      %s48 = sadd.s32 %s47, 1
      %s49 = scalar_select %p46, %s47, %s48
      %p52 = pneg %p46
      %p53 = scmp.eq.s32.totalorder %s11, 1
      %p54 = por %p52, %p53
      %p55 = scmp.ne.s32.totalorder %s47, %s50
      %p56 = scmp.eq.s32.totalorder %s11, 0
      %p57 = por %p55, %p56
      %p58 = scmp.ne.s32.totalorder %s47, %s50
      %p59 = scmp.eq.s32.totalorder %s16, 1
      %p60 = por %p58, %p59
      %p61 = scmp.ne.s32.totalorder %s50, %s51
      %p62 = scmp.eq.s32.totalorder %s16, 0
      %p63 = por %p61, %p62
      %p64 = scmp.ne.s32.totalorder %s50, %s51
      %p65 = scmp.eq.s32.totalorder %s17, 1
      %p66 = por %p64, %p65
      %p68 = scmp.ne.s32.totalorder %s51, %s67
      %p69 = scmp.eq.s32.totalorder %s17, 0
      %p70 = por %p68, %p69
      %s71 = ssub.s32 %s11, %s18
      %p72 = scmp.eq.s32.totalorder %s71, 0
      %s74 = sadd.s32 %s73, 1
      %s75 = scalar_select %p72, %s73, %s74
      %p78 = pneg %p72
      %p79 = scmp.eq.s32.totalorder %s11, 1
      %p80 = por %p78, %p79
      %p81 = scmp.ne.s32.totalorder %s73, %s76
      %p82 = scmp.eq.s32.totalorder %s11, 0
      %p83 = por %p81, %p82
      %p84 = scmp.ne.s32.totalorder %s73, %s76
      %p85 = scmp.eq.s32.totalorder %s16, 1
      %p86 = por %p84, %p85
      %p87 = scmp.ne.s32.totalorder %s76, %s77
      %p88 = scmp.eq.s32.totalorder %s16, 0
      %p89 = por %p87, %p88
      %p90 = scmp.ne.s32.totalorder %s76, %s77
      %p91 = scmp.eq.s32.totalorder %s17, 1
      %p92 = por %p90, %p91
      %p94 = scmp.ne.s32.totalorder %s77, %s93
      %p95 = scmp.eq.s32.totalorder %s17, 0
      %p96 = por %p94, %p95
      %p97 = scmp.le.s32.totalorder 1, %s11
      %p98 = scmp.lt.s32.totalorder %s11, 3
      %p99 = pnand %p97, %p98
      %p100 = pneg %p99
      // Predicated region
      $region9: #{tpu_custom_call.1} parent=5 // pred_check
        _
      $region10: #{tpu_custom_call.1} parent=5 // pred_check_branch
        %102 = sbr.rel (%p99) target = $region12
      $region11: #{tpu_custom_call.1} parent=5 // pred_region
        %s103 = ssub.s32 %s11, 1
      $region12: #{tpu_custom_call.1} parent=5 // pred_fallthru
        _
      %p104 = scmp.lt.s32.totalorder %s11, 2
      // Predicated region
      $region13: #{tpu_custom_call.1} parent=5 // pred_check
        %p105 = pneg %p104
      $region14: #{tpu_custom_call.1} parent=5 // pred_check_branch
        %107 = sbr.rel (%p105) target = $region16
      $region15: #{tpu_custom_call.1} parent=5 // pred_region
        // Predicated region
        $region17: #{tpu_custom_call.1} parent=15 // pred_check
          %p108 = pneg %p31
        $region18: #{tpu_custom_call.1} parent=15 // pred_check_branch
          %110 = sbr.rel (%p108) target = $region20
        $region19: #{tpu_custom_call.1} parent=15 // pred_region
          %p111 = scmp.lt.s32.totalorder %s11, 1
          %s112 = scalar_select %p111, %s11, 1
          %s113 = smul.addr %s112, 8
          %s114 = scalar_lea.vmem %s0, %s113
        $region20: #{tpu_custom_call.1} parent=15 // pred_fallthru
          _
        // Predicated region
        $region21: #{tpu_custom_call.1} parent=15 // pred_check
          %p115 = pneg %p57
        $region22: #{tpu_custom_call.1} parent=15 // pred_check_branch
          %117 = sbr.rel (%p115) target = $region24
        $region23: #{tpu_custom_call.1} parent=15 // pred_region
          %p118 = scmp.lt.s32.totalorder %s11, 1
          %s119 = scalar_select %p118, %s11, 1
          %s120 = smul.addr %s119, 8
          %s121 = scalar_lea.vmem %s1, %s120
        $region24: #{tpu_custom_call.1} parent=15 // pred_fallthru
          _
      $region16: #{tpu_custom_call.1} parent=5 // pred_fallthru
        _
      %p122 = scmp.le.s32.totalorder 1, %s11
      %p123 = scmp.lt.s32.totalorder %s11, 3
      %p124 = pnand %p122, %p123
      %p125 = pneg %p124
      // Predicated region
      $region25: #{tpu_custom_call.1} parent=5 // pred_check
        _
      $region26: #{tpu_custom_call.1} parent=5 // pred_check_branch
        %127 = sbr.rel (%p124) target = $region28
      $region27: #{tpu_custom_call.1} parent=5 // pred_region
        %s128 = ssub.s32 %s11, 1
        %p129 = scmp.lt.s32.totalorder %s16, 1
        %s130 = scalar_select %p129, %s16, 1
        %s131 = smul.addr %s130, 8
        %s132 = scalar_lea.vmem %s0, %s131
        %p133 = pneg %p37
        %p134 = pneg %p34
        %p135 = scmp.lt.s32.totalorder %s16, 1
        %s136 = scalar_select %p135, %s16, 1
        %s137 = smul.addr %s136, 8
        %s138 = scalar_lea.vmem %s1, %s137
        %p139 = pneg %p63
        %p140 = pneg %p60
        %p141 = pneg %p89
        %p142 = pneg %p86
        %s143 = sand.u32 %s76, 1
        %s144 = scalar_lea.sflag [#allocation3], %s143
        %s145 = sand.u32 %s76, 1
        %s146 = smul.addr %s145, 8
        %s147 = scalar_lea.vmem [#allocation2], %s146
        %p148 = scmp.lt.s32.totalorder %s16, 1
        %s149 = scalar_select %p148, %s16, 1
        %s150 = smul.addr %s149, 8
        %s151 = scalar_lea.vmem %s0, %s150
        %p152 = scmp.lt.s32.totalorder %s16, 1
        %s153 = scalar_select %p152, %s16, 1
        %s154 = smul.addr %s153, 8
        %s155 = scalar_lea.vmem %s1, %s154
        %v156 = vld [vmem:[%s151] sm:$0xff]
        %v157 = vld [vmem:[%s155] sm:$0xff]
        %s158 = smul.u32 %s16, 8
        %v159 = vlaneseq
        %v160 = vshrl.u32 %v159, 7
        %v161 = vstv %s158
        %v162 = vadd.s32 %v161, %v160
        %vm163 = vcmp.lt.s32.totalorder %v162, 14
        %v164 = vsel %vm163, 1, 0
        %v165 = vcvt.s32.f32 %v164
        %vm166 = vcmp.eq.s32.totalorder %v164, 1
        %v167 = vsel %vm166, %v156, 0.0
        %vm168 = vcmask 261120
        %v169 = vsel %vm168, %v167, -inf
        %170 = vmax.xlane.f32.xlu0 %v169
        %v171 = vpop.xlane.xlu0 %170
        %v172 = vsub.f32 %v167, %v171
        %v173 = vmul.f32 %v172, 1.442695
        %v174 = vpow.pop %v173
        %v175 = vlaneseq
        %v176 = vand.u32 %v175, 127
        %177 = vset.pattern.permute.xlu0 0
        %178 = vperm.xlu0 %177, %v157
        %v179 = vpop.permute.xlu0 %178
        %vm180 = vcmp.eq.s32.totalorder %v176, %v179
        %v181 = vsel %vm180, %v174, 0.0
        %v182 = vsel %vm168, %v174, 0.0
        %183 = vadd.xlane.f32.xlu0 %v182
        %v184 = vpop.xlane.xlu0 %183
        %v185 = vsel %vm168, %v181, 0.0
        %186 = vadd.xlane.f32.xlu0 %v185
        %v187 = vpop.xlane.xlu0 %186
        %v188 = vrcp.pop %v184
        %vm189 = vcmp.ge.s32.totalorder %v157, 0
        %vm190 = vcmp.lt.s32.totalorder %v157, 32
        %vm191 = vmand %vm189, %vm190
        %v192 = vsel %vm191, 1, 0
        %v193 = vcvt.s32.f32 %v192
        %v194 = vmul.f32 %v165, %v187
        %v195 = vmul.f32 %v194, %v188
        %vm196 = vcmask 7168
        %v197 = vsel %vm196, %v195, 0.0
        %198 = vadd.xlane.f32.xlu0 %v197
        %v199 = vpop.xlane.xlu0 %198
        %v200 = vrot.slane %v199, 4
        %v201 = vadd.f32 %v199, %v200
        %v202 = vrot.slane %v201, 2
        %v203 = vadd.f32 %v201, %v202
        %v204 = vrot.slane %v203, 1
        %v205 = vadd.f32 %v203, %v204
        %s206 = vtos %v205
        %s207 = ssub.s32 14, %s158
        %p208 = scmp.lt.s32.totalorder %s207, 8
        %s209 = scalar_select %p208, %s207, 8
        %s210 = scvt.s32.f32 %s209
        %v211 = vmul.f32 %v165, %v193
        %v212 = vsel %vm196, %v211, 0.0
        %213 = vadd.xlane.f32.xlu0 %v212
        %v214 = vpop.xlane.xlu0 %213
        %v215 = vrot.slane %v214, 4
        %v216 = vadd.f32 %v214, %v215
        %v217 = vrot.slane %v216, 2
        %v218 = vadd.f32 %v216, %v217
        %v219 = vrot.slane %v218, 1
        %v220 = vadd.f32 %v218, %v219
        %s221 = vtos %v220
        %vm222 = vcmp.eq.s32.totalorder %v160, 0
        %vm223 = vcmp.eq.s32.totalorder %v176, 0
        %vm224 = vmand %vm222, %vm223
        %vm225 = vcmp.eq.s32.totalorder %v176, 1
        %vm226 = vmand %vm222, %vm225
        %vm227 = vcmp.eq.s32.totalorder %v176, 2
        %vm228 = vmand %vm222, %vm227
        %v229 = vstv %s221
        %v230 = vsel %vm228, %v229, 0.0
        %v231 = vstv %s210
        %v232 = vsel %vm226, %v231, %v230
        %v233 = vstv %s206
        %v234 = vsel %vm224, %v233, %v232
        %235 = vst [vmem:[%s147] sm:$0xff] %v234
        %s236 = sand.u32 %s76, 1
        %s237 = scalar_lea.sflag [#allocation3], %s236
        %s238 = sand.u32 %s76, 1
        %s239 = smul.addr %s238, 8
        %s240 = scalar_lea.vmem [#allocation2], %s239
        // Predicated region
        $region29: #{tpu_custom_call.1} parent=27 // pred_check
          %p241 = pneg %p86
        $region30: #{tpu_custom_call.1} parent=27 // pred_check_branch
          %243 = sbr.rel (%p241) target = $region32
        $region31: #{tpu_custom_call.1} parent=27 // pred_region
          %s245 = ssub.s32 128, 128
          %246 = vsyncadd %s237, %s245
          %s247 = smul.addr %s16, 128
          %s248 = scalar_lea.hbm %s2, %s247
          %s250 = sshll.u32 %s240, 4
          %s251 = int_to_ptr.vmem [resolvable:$true] %s250
          %253 = dma.vmem_to_hbm [thread:$0]  %s251, 128, %s248, %s237
        $region32: #{tpu_custom_call.1} parent=27 // pred_fallthru
          _
      $region28: #{tpu_custom_call.1} parent=5 // pred_fallthru
        _
      %p254 = scmp.le.s32.totalorder 2, %s11
      // Predicated region
      $region33: #{tpu_custom_call.1} parent=5 // pred_check
        %p255 = pneg %p254
      $region34: #{tpu_custom_call.1} parent=5 // pred_check_branch
        %257 = sbr.rel (%p255) target = $region36
      $region35: #{tpu_custom_call.1} parent=5 // pred_region
        %s258 = ssub.s32 %s11, 2
        // Predicated region
        $region37: #{tpu_custom_call.1} parent=35 // pred_check
          %p259 = pneg %p92
        $region38: #{tpu_custom_call.1} parent=35 // pred_check_branch
          %261 = sbr.rel (%p259) target = $region40
        $region39: #{tpu_custom_call.1} parent=35 // pred_region
          %s262 = sand.u32 %s77, 1
          %s263 = scalar_lea.sflag [#allocation3], %s262
          %s264 = sand.u32 %s77, 1
          %s265 = smul.addr %s264, 8
          %s266 = scalar_lea.vmem [#allocation2], %s265
          %267 = dma.done %s263, 128
        $region40: #{tpu_custom_call.1} parent=35 // pred_fallthru
          _
      $region36: #{tpu_custom_call.1} parent=5 // pred_fallthru
        _
    $region6: #{tpu_custom_call.1} parent=1 // loop_footer
      %s15 = sadd.s32 1, %s11
    $region7: #{tpu_custom_call.1} parent=1 // loop_footer_branch
      %10 = sbr.rel target = $region3
    $region8: #{tpu_custom_call.1} parent=1 // loop_exit
      _
    %268 = vsyncpa [#allocation3], 1
    %s269 = scalar_lea.sflag [#allocation3], 1
    %270 = vsyncpa %s269, 1

</llo_original>
